<compile_context>
chip_gen: v6e
topology: v6e:2x2x1
jax: 0.10.0
libtpu: 0.0.40
codegen_flags: <defaults>
</compile_context>

<pallas_src>
import jax
import jax.numpy as jnp
from jax.experimental import pallas as pl
from jax.experimental.pallas import tpu as pltpu

K_CONV = 5   # nn.Conv1d(kernel_size=5, padding=2)
PAD = 2      # conv padding
OFF = 8      # sublane-aligned row offset of the valid P rows inside the scratch


def _gelu_tanh(x):
    c = 0.7978845608028654  # sqrt(2/pi)
    return 0.5 * x * (1.0 + jnp.tanh(c * (x + 0.044715 * x * x * x)))


def ccl_fused_kernel(ci_ref, adj_ref, wg_ref, bg_ref, pos_ref,
                     wc_ref, bc_ref, wo_ref, bo_ref, o_ref, xpad_ref):
    B, G, F = ci_ref.shape
    P = adj_ref.shape[1]
    E = wg_ref.shape[1]

    # ---------------- encoder stand-in ----------------
    # TODO(synk): CCLEncoder's class definition was not provided in the source
    # file; this is a deterministic stand-in (gene linear embed + GELU +
    # adjacency-normalized pathway pooling) producing the (B, P, E) tensor the
    # conv/linear head expects. The conv+ReLU+Linear head matches the reference.
    ci = ci_ref[...]                           # (B, G, F)
    wg = wg_ref[...]                           # (F, E)
    base = bg_ref[...] + pos_ref[...]          # (G, E)  batch-independent, hoisted

    # Gene embed: K=F contraction unrolled as F lane-dense VPU FMAs over the
    # whole batch at once (avoids a K=4 MXU pass; batch folded into M).
    h = base + ci[:, :, 0:1] * wg[0:1, :]                  # (B, G, E)
    for f in range(1, F):                                  # static unroll
        h = h + ci[:, :, f:f + 1] * wg[f:f + 1, :]
    h = _gelu_tanh(h)                                      # (B, G, E)

    # Pathway pooling: one batched MXU matmul + one batched lane reduction
    # for the per-pathway membership counts; normalize via EUP reciprocal.
    adj = adj_ref[...]                                     # (B, P, G)
    pooled = jnp.einsum('bpg,bge->bpe', adj, h,
                        preferred_element_type=jnp.float32)     # (B, P, E)
    denom = jnp.sum(adj, axis=-1, keepdims=True) + 1e-6          # (B, P, 1)
    x_enc = pooled * pl.reciprocal(denom, approx=True)           # (B, P, E)

    # -------- Conv1d(E->1, k=5, pad=2) + ReLU + Linear(P->D) head --------
    # Conv padding handled inside a zero-initialized VMEM scratch; valid rows
    # stored at an 8-aligned offset so the store stays sublane-aligned.
    xpad_ref[...] = jnp.zeros_like(xpad_ref)
    xpad_ref[:, OFF:OFF + P, :] = x_enc

    wc = wc_ref[...]                                       # (K_CONV, E), load once
    s0 = OFF - PAD
    acc = xpad_ref[:, s0:s0 + P, :] * wc[0:1, :]           # lane-dense (B, P, E)
    for k in range(1, K_CONV):                             # static unroll over taps
        s = OFF - PAD + k
        acc = acc + xpad_ref[:, s:s + P, :] * wc[k:k + 1, :]
    conv = jnp.sum(acc, axis=-1, keepdims=True) + bc_ref[...]    # ONE lane reduce
    y = jnp.maximum(conv, 0.0)                                   # ReLU -> (B, P, 1)

    out = jnp.sum(y * wo_ref[...][None, :, :], axis=1) + bo_ref[...]   # (B, D)
    o_ref[...] = out.astype(o_ref.dtype)


def ccl_predictor_forward(ccl_input, ccl_adj, params):
    B, G, F = ccl_input.shape
    P = ccl_adj.shape[1]
    E = params["w_gene"].shape[1]
    D = params["w_out"].shape[1]

    flops = (2 * B * G * F * E + 2 * B * P * G * E
             + 2 * B * P * E * K_CONV + 2 * B * P * D)
    bytes_accessed = 4 * (B * G * F + B * P * G + F * E + E + G * E
                          + K_CONV * E + 1 + P * D + D + B * D)
    cost = pl.CostEstimate(flops=flops, transcendentals=B * G * E,
                           bytes_accessed=bytes_accessed)

    return pl.pallas_call(
        ccl_fused_kernel,
        out_shape=jax.ShapeDtypeStruct((B, D), jnp.float32),
        grid=(1,),   # everything fits comfortably in VMEM -> one grid step
        in_specs=[
            pl.BlockSpec((B, G, F), lambda i: (0, 0, 0)),   # ccl_input
            pl.BlockSpec((B, P, G), lambda i: (0, 0, 0)),   # ccl_adj
            pl.BlockSpec((F, E), lambda i: (0, 0)),         # w_gene
            pl.BlockSpec((1, E), lambda i: (0, 0)),         # b_gene
            pl.BlockSpec((G, E), lambda i: (0, 0)),         # pos
            pl.BlockSpec((K_CONV, E), lambda i: (0, 0)),    # w_conv
            pl.BlockSpec((1, 1), lambda i: (0, 0)),         # b_conv
            pl.BlockSpec((P, D), lambda i: (0, 0)),         # w_out
            pl.BlockSpec((1, D), lambda i: (0, 0)),         # b_out
        ],
        out_specs=pl.BlockSpec((B, D), lambda i: (0, 0)),
        scratch_shapes=[pltpu.VMEM((B, P + 2 * OFF, E), jnp.float32)],
        compiler_params=pltpu.CompilerParams(dimension_semantics=("arbitrary",)),
        cost_estimate=cost,
    )(ccl_input, ccl_adj, params["w_gene"], params["b_gene"], params["pos"],
      params["w_conv"], params["b_conv"], params["w_out"], params["b_out"])


def ccl_predictor_reference(ccl_input, ccl_adj, params):
    """Pure-JAX reference with identical math (exact division)."""
    P = ccl_adj.shape[1]
    h = (jnp.einsum('bgf,fe->bge', ccl_input, params["w_gene"])
         + params["b_gene"] + params["pos"])
    h = _gelu_tanh(h)
    pooled = jnp.einsum('bpg,bge->bpe', ccl_adj, h)
    denom = jnp.sum(ccl_adj, axis=-1, keepdims=True) + 1e-6
    x = pooled / denom                                            # (B, P, E)
    xp = jnp.pad(x, ((0, 0), (PAD, PAD), (0, 0)))
    conv = sum(jnp.einsum('bpe,e->bp', xp[:, k:k + P, :], params["w_conv"][k])
               for k in range(K_CONV))
    y = jnp.maximum(conv + params["b_conv"][0, 0], 0.0)           # (B, P)
    return y @ params["w_out"] + params["b_out"]


def init_params(key, G, F, E, P, D):
    ks = jax.random.split(key, 7)
    s = 0.1
    return dict(
        # encoder stand-in params
        w_gene=s * jax.random.normal(ks[0], (F, E), jnp.float32),
        b_gene=s * jax.random.normal(ks[1], (1, E), jnp.float32),
        pos=s * jax.random.normal(ks[2], (G, E), jnp.float32),
        # head params (PyTorch shapes stored transposed/permuted)
        w_conv=s * jax.random.normal(ks[3], (K_CONV, E), jnp.float32),  # Conv1d (1,E,5)
        b_conv=s * jax.random.normal(ks[4], (1, 1), jnp.float32),
        w_out=s * jax.random.normal(ks[5], (P, D), jnp.float32),        # Linear (D,P).T
        b_out=s * jax.random.normal(ks[6], (1, D), jnp.float32),
    )


if __name__ == "__main__":
    # small shapes consistent with the module:
    # B=2 batch, G=64 genes, F=4 in_features, E=32 embed_dim,
    # P=16 ccl_num_pathways, D=8 output_dim
    B, G, F, E, P, D = 2, 64, 4, 32, 16, 8
    key = jax.random.PRNGKey(0)
    k_in, k_adj, k_par = jax.random.split(key, 3)
    ccl_input = jax.random.normal(k_in, (B, G, F), jnp.float32)
    ccl_adj = (jax.random.uniform(k_adj, (B, P, G)) > 0.5).astype(jnp.float32)
    params = init_params(k_par, G, F, E, P, D)

    fwd = jax.jit(lambda a, b: ccl_predictor_forward(a, b, params))
    out = fwd(ccl_input, ccl_adj)
    jax.block_until_ready(out)
    assert out.shape == (B, D) and out.dtype == jnp.float32

    ref = ccl_predictor_reference(ccl_input, ccl_adj, params)
    assert bool(jnp.allclose(out, ref, rtol=2e-2, atol=1e-3)), "mismatch vs JAX reference"
    print("KERNEL_OK")
</pallas_src>

<mosaic_0001>
module attributes {stable_mosaic.version = 11 : i64} {
  func.func @ccl_fused_kernel(%arg0: i32, %arg1: memref<2x64x4xf32, #tpu.memory_space<vmem>>, %arg2: memref<2x16x64xf32, #tpu.memory_space<vmem>>, %arg3: memref<4x32xf32, #tpu.memory_space<vmem>>, %arg4: memref<1x32xf32, #tpu.memory_space<vmem>>, %arg5: memref<64x32xf32, #tpu.memory_space<vmem>>, %arg6: memref<5x32xf32, #tpu.memory_space<vmem>>, %arg7: memref<1x1xf32, #tpu.memory_space<vmem>>, %arg8: memref<16x8xf32, #tpu.memory_space<vmem>>, %arg9: memref<1x8xf32, #tpu.memory_space<vmem>>, %arg10: memref<2x8xf32, #tpu.memory_space<vmem>>, %arg11: memref<2x32x32xf32, #tpu.memory_space<vmem>>) attributes {dimension_semantics = [#tpu.dimension_semantics<arbitrary>], iteration_bounds = array<i64: 1>, scalar_prefetch = 0 : i64, scratch_operands = 1 : i64, tpu.core_type = #tpu.core_type<tc>, window_params = [{pipeline_mode = #tpu.pipeline_mode<synchronous>, transform_indices = @transform_0, window_bounds = array<i64: 2, 64, 4>}, {pipeline_mode = #tpu.pipeline_mode<synchronous>, transform_indices = @transform_1, window_bounds = array<i64: 2, 16, 64>}, {pipeline_mode = #tpu.pipeline_mode<synchronous>, transform_indices = @transform_2, window_bounds = array<i64: 4, 32>}, {pipeline_mode = #tpu.pipeline_mode<synchronous>, transform_indices = @transform_3, window_bounds = array<i64: 1, 32>}, {pipeline_mode = #tpu.pipeline_mode<synchronous>, transform_indices = @transform_4, window_bounds = array<i64: 64, 32>}, {pipeline_mode = #tpu.pipeline_mode<synchronous>, transform_indices = @transform_5, window_bounds = array<i64: 5, 32>}, {pipeline_mode = #tpu.pipeline_mode<synchronous>, transform_indices = @transform_6, window_bounds = array<i64: 1, 1>}, {pipeline_mode = #tpu.pipeline_mode<synchronous>, transform_indices = @transform_7, window_bounds = array<i64: 16, 8>}, {pipeline_mode = #tpu.pipeline_mode<synchronous>, transform_indices = @transform_8, window_bounds = array<i64: 1, 8>}, {pipeline_mode = #tpu.pipeline_mode<synchronous>, transform_indices = @transform_9, window_bounds = array<i64: 2, 8>}]} {
    %c0 = arith.constant 0 : index
    %c0_0 = arith.constant 0 : index
    %c0_1 = arith.constant 0 : index
    %0 = vector.load %arg1[%c0, %c0_0, %c0_1] : memref<2x64x4xf32, #tpu.memory_space<vmem>>, vector<2x64x4xf32>
    %c0_2 = arith.constant 0 : index
    %c0_3 = arith.constant 0 : index
    %1 = vector.load %arg3[%c0_2, %c0_3] : memref<4x32xf32, #tpu.memory_space<vmem>>, vector<4x32xf32>
    %c0_4 = arith.constant 0 : index
    %c0_5 = arith.constant 0 : index
    %2 = vector.load %arg4[%c0_4, %c0_5] : memref<1x32xf32, #tpu.memory_space<vmem>>, vector<1x32xf32>
    %c0_6 = arith.constant 0 : index
    %c0_7 = arith.constant 0 : index
    %3 = vector.load %arg5[%c0_6, %c0_7] : memref<64x32xf32, #tpu.memory_space<vmem>>, vector<64x32xf32>
    %4 = vector.broadcast %2 : vector<1x32xf32> to vector<64x32xf32>
    %5 = arith.addf %4, %3 : vector<64x32xf32>
    %6 = vector.extract_strided_slice %0 {offsets = [0, 0, 0], sizes = [2, 64, 1], strides = [1, 1, 1]} : vector<2x64x4xf32> to vector<2x64x1xf32>
    %7 = vector.extract_strided_slice %1 {offsets = [0, 0], sizes = [1, 32], strides = [1, 1]} : vector<4x32xf32> to vector<1x32xf32>
    %8 = vector.shape_cast %7 : vector<1x32xf32> to vector<1x1x32xf32>
    %9 = vector.broadcast %6 : vector<2x64x1xf32> to vector<2x64x32xf32>
    %10 = vector.broadcast %8 : vector<1x1x32xf32> to vector<2x64x32xf32>
    %11 = arith.mulf %9, %10 : vector<2x64x32xf32>
    %12 = vector.shape_cast %5 : vector<64x32xf32> to vector<1x64x32xf32>
    %13 = vector.broadcast %12 : vector<1x64x32xf32> to vector<2x64x32xf32>
    %14 = arith.addf %13, %11 : vector<2x64x32xf32>
    %15 = vector.extract_strided_slice %0 {offsets = [0, 0, 1], sizes = [2, 64, 1], strides = [1, 1, 1]} : vector<2x64x4xf32> to vector<2x64x1xf32>
    %16 = vector.extract_strided_slice %1 {offsets = [1, 0], sizes = [1, 32], strides = [1, 1]} : vector<4x32xf32> to vector<1x32xf32>
    %17 = vector.shape_cast %16 : vector<1x32xf32> to vector<1x1x32xf32>
    %18 = vector.broadcast %15 : vector<2x64x1xf32> to vector<2x64x32xf32>
    %19 = vector.broadcast %17 : vector<1x1x32xf32> to vector<2x64x32xf32>
    %20 = arith.mulf %18, %19 : vector<2x64x32xf32>
    %21 = arith.addf %14, %20 : vector<2x64x32xf32>
    %22 = vector.extract_strided_slice %0 {offsets = [0, 0, 2], sizes = [2, 64, 1], strides = [1, 1, 1]} : vector<2x64x4xf32> to vector<2x64x1xf32>
    %23 = vector.extract_strided_slice %1 {offsets = [2, 0], sizes = [1, 32], strides = [1, 1]} : vector<4x32xf32> to vector<1x32xf32>
    %24 = vector.shape_cast %23 : vector<1x32xf32> to vector<1x1x32xf32>
    %25 = vector.broadcast %22 : vector<2x64x1xf32> to vector<2x64x32xf32>
    %26 = vector.broadcast %24 : vector<1x1x32xf32> to vector<2x64x32xf32>
    %27 = arith.mulf %25, %26 : vector<2x64x32xf32>
    %28 = arith.addf %21, %27 : vector<2x64x32xf32>
    %29 = vector.extract_strided_slice %0 {offsets = [0, 0, 3], sizes = [2, 64, 1], strides = [1, 1, 1]} : vector<2x64x4xf32> to vector<2x64x1xf32>
    %30 = vector.extract_strided_slice %1 {offsets = [3, 0], sizes = [1, 32], strides = [1, 1]} : vector<4x32xf32> to vector<1x32xf32>
    %31 = vector.shape_cast %30 : vector<1x32xf32> to vector<1x1x32xf32>
    %32 = vector.broadcast %29 : vector<2x64x1xf32> to vector<2x64x32xf32>
    %33 = vector.broadcast %31 : vector<1x1x32xf32> to vector<2x64x32xf32>
    %34 = arith.mulf %32, %33 : vector<2x64x32xf32>
    %35 = arith.addf %28, %34 : vector<2x64x32xf32>
    %cst = arith.constant 5.000000e-01 : f32
    %36 = vector.broadcast %cst : f32 to vector<2x64x32xf32>
    %37 = arith.mulf %36, %35 : vector<2x64x32xf32>
    %cst_8 = arith.constant 4.471500e-02 : f32
    %38 = vector.broadcast %cst_8 : f32 to vector<2x64x32xf32>
    %39 = arith.mulf %38, %35 : vector<2x64x32xf32>
    %40 = arith.mulf %39, %35 : vector<2x64x32xf32>
    %41 = arith.mulf %40, %35 : vector<2x64x32xf32>
    %42 = arith.addf %35, %41 : vector<2x64x32xf32>
    %cst_9 = arith.constant 0.797884583 : f32
    %43 = vector.broadcast %cst_9 : f32 to vector<2x64x32xf32>
    %44 = arith.mulf %43, %42 : vector<2x64x32xf32>
    %45 = math.tanh %44 : vector<2x64x32xf32>
    %cst_10 = arith.constant 1.000000e+00 : f32
    %46 = vector.broadcast %cst_10 : f32 to vector<2x64x32xf32>
    %47 = arith.addf %46, %45 : vector<2x64x32xf32>
    %48 = arith.mulf %37, %47 : vector<2x64x32xf32>
    %c0_11 = arith.constant 0 : index
    %c0_12 = arith.constant 0 : index
    %c0_13 = arith.constant 0 : index
    %49 = vector.load %arg2[%c0_11, %c0_12, %c0_13] : memref<2x16x64xf32, #tpu.memory_space<vmem>>, vector<2x16x64xf32>
    "tpu.trace_start"() <{level = 10 : i32, message = "bpg,bge->bpe"}> : () -> ()
    %cst_14 = arith.constant dense<0.000000e+00> : vector<2x16x32xf32>
    %50 = tpu.matmul %49, %48, %cst_14 {dimension_numbers = #tpu.dot_dimension_numbers<[2], [1], [1], [2], [0, 0, 0, 1, 1, 2], [0], [0]>} : vector<2x16x64xf32>, vector<2x64x32xf32>, vector<2x16x32xf32> -> vector<2x16x32xf32>
    "tpu.trace_stop"() : () -> ()
    %cst_15 = arith.constant dense<0.000000e+00> : vector<2x16xf32>
    %51 = vector.multi_reduction <add>, %49, %cst_15 [2] : vector<2x16x64xf32> to vector<2x16xf32>
    %52 = vector.shape_cast %51 : vector<2x16xf32> to vector<2x16x1xf32>
    %cst_16 = arith.constant 9.99999997E-7 : f32
    %53 = vector.broadcast %cst_16 : f32 to vector<2x16x1xf32>
    %54 = arith.addf %52, %53 : vector<2x16x1xf32>
    %55 = tpu.reciprocal %54 {approx = true} : vector<2x16x1xf32> -> vector<2x16x1xf32>
    %56 = vector.broadcast %55 : vector<2x16x1xf32> to vector<2x16x32xf32>
    %57 = arith.mulf %50, %56 : vector<2x16x32xf32>
    %cst_17 = arith.constant 0.000000e+00 : f32
    %58 = vector.broadcast %cst_17 : f32 to vector<2x32x32xf32>
    %c0_18 = arith.constant 0 : index
    %c0_19 = arith.constant 0 : index
    %c0_20 = arith.constant 0 : index
    %59 = vector.load %arg11[%c0_18, %c0_19, %c0_20] : memref<2x32x32xf32, #tpu.memory_space<vmem>>, vector<2x32x32xf32>
    tpu.vector_store %arg11[%c0_18, %c0_19, %c0_20], %58 {strides = array<i32>} : memref<2x32x32xf32, #tpu.memory_space<vmem>>, vector<2x32x32xf32>,
    %c0_21 = arith.constant 0 : index
    %c8 = arith.constant 8 : index
    %c0_22 = arith.constant 0 : index
    %60 = vector.load %arg11[%c0_21, %c8, %c0_22] : memref<2x32x32xf32, #tpu.memory_space<vmem>>, vector<2x16x32xf32>
    tpu.vector_store %arg11[%c0_21, %c8, %c0_22], %57 {strides = array<i32>} : memref<2x32x32xf32, #tpu.memory_space<vmem>>, vector<2x16x32xf32>,
    %c0_23 = arith.constant 0 : index
    %c0_24 = arith.constant 0 : index
    %61 = vector.load %arg6[%c0_23, %c0_24] : memref<5x32xf32, #tpu.memory_space<vmem>>, vector<5x32xf32>
    %c0_25 = arith.constant 0 : index
    %c6 = arith.constant 6 : index
    %c0_26 = arith.constant 0 : index
    %62 = vector.load %arg11[%c0_25, %c6, %c0_26] : memref<2x32x32xf32, #tpu.memory_space<vmem>>, vector<2x16x32xf32>
    %63 = vector.extract_strided_slice %61 {offsets = [0, 0], sizes = [1, 32], strides = [1, 1]} : vector<5x32xf32> to vector<1x32xf32>
    %64 = vector.shape_cast %63 : vector<1x32xf32> to vector<1x1x32xf32>
    %65 = vector.broadcast %64 : vector<1x1x32xf32> to vector<2x16x32xf32>
    %66 = arith.mulf %62, %65 : vector<2x16x32xf32>
    %c0_27 = arith.constant 0 : index
    %c7 = arith.constant 7 : index
    %c0_28 = arith.constant 0 : index
    %67 = vector.load %arg11[%c0_27, %c7, %c0_28] : memref<2x32x32xf32, #tpu.memory_space<vmem>>, vector<2x16x32xf32>
    %68 = vector.extract_strided_slice %61 {offsets = [1, 0], sizes = [1, 32], strides = [1, 1]} : vector<5x32xf32> to vector<1x32xf32>
    %69 = vector.shape_cast %68 : vector<1x32xf32> to vector<1x1x32xf32>
    %70 = vector.broadcast %69 : vector<1x1x32xf32> to vector<2x16x32xf32>
    %71 = arith.mulf %67, %70 : vector<2x16x32xf32>
    %72 = arith.addf %66, %71 : vector<2x16x32xf32>
    %c0_29 = arith.constant 0 : index
    %c8_30 = arith.constant 8 : index
    %c0_31 = arith.constant 0 : index
    %73 = vector.load %arg11[%c0_29, %c8_30, %c0_31] : memref<2x32x32xf32, #tpu.memory_space<vmem>>, vector<2x16x32xf32>
    %74 = vector.extract_strided_slice %61 {offsets = [2, 0], sizes = [1, 32], strides = [1, 1]} : vector<5x32xf32> to vector<1x32xf32>
    %75 = vector.shape_cast %74 : vector<1x32xf32> to vector<1x1x32xf32>
    %76 = vector.broadcast %75 : vector<1x1x32xf32> to vector<2x16x32xf32>
    %77 = arith.mulf %73, %76 : vector<2x16x32xf32>
    %78 = arith.addf %72, %77 : vector<2x16x32xf32>
    %c0_32 = arith.constant 0 : index
    %c9 = arith.constant 9 : index
    %c0_33 = arith.constant 0 : index
    %79 = vector.load %arg11[%c0_32, %c9, %c0_33] : memref<2x32x32xf32, #tpu.memory_space<vmem>>, vector<2x16x32xf32>
    %80 = vector.extract_strided_slice %61 {offsets = [3, 0], sizes = [1, 32], strides = [1, 1]} : vector<5x32xf32> to vector<1x32xf32>
    %81 = vector.shape_cast %80 : vector<1x32xf32> to vector<1x1x32xf32>
    %82 = vector.broadcast %81 : vector<1x1x32xf32> to vector<2x16x32xf32>
    %83 = arith.mulf %79, %82 : vector<2x16x32xf32>
    %84 = arith.addf %78, %83 : vector<2x16x32xf32>
    %c0_34 = arith.constant 0 : index
    %c10 = arith.constant 10 : index
    %c0_35 = arith.constant 0 : index
    %85 = vector.load %arg11[%c0_34, %c10, %c0_35] : memref<2x32x32xf32, #tpu.memory_space<vmem>>, vector<2x16x32xf32>
    %86 = vector.extract_strided_slice %61 {offsets = [4, 0], sizes = [1, 32], strides = [1, 1]} : vector<5x32xf32> to vector<1x32xf32>
    %87 = vector.shape_cast %86 : vector<1x32xf32> to vector<1x1x32xf32>
    %88 = vector.broadcast %87 : vector<1x1x32xf32> to vector<2x16x32xf32>
    %89 = arith.mulf %85, %88 : vector<2x16x32xf32>
    %90 = arith.addf %84, %89 : vector<2x16x32xf32>
    %cst_36 = arith.constant dense<0.000000e+00> : vector<2x16xf32>
    %91 = vector.multi_reduction <add>, %90, %cst_36 [2] : vector<2x16x32xf32> to vector<2x16xf32>
    %92 = vector.shape_cast %91 : vector<2x16xf32> to vector<2x16x1xf32>
    %c0_37 = arith.constant 0 : index
    %c0_38 = arith.constant 0 : index
    %93 = vector.load %arg7[%c0_37, %c0_38] : memref<1x1xf32, #tpu.memory_space<vmem>>, vector<1x1xf32>
    %94 = vector.shape_cast %93 : vector<1x1xf32> to vector<1x1x1xf32>
    %95 = vector.broadcast %94 : vector<1x1x1xf32> to vector<2x16x1xf32>
    %96 = arith.addf %92, %95 : vector<2x16x1xf32>
    %cst_39 = arith.constant 0.000000e+00 : f32
    %97 = vector.broadcast %cst_39 : f32 to vector<2x16x1xf32>
    %98 = arith.maximumf %96, %97 : vector<2x16x1xf32>
    %c0_40 = arith.constant 0 : index
    %c0_41 = arith.constant 0 : index
    %99 = vector.load %arg8[%c0_40, %c0_41] : memref<16x8xf32, #tpu.memory_space<vmem>>, vector<16x8xf32>
    %100 = vector.shape_cast %99 : vector<16x8xf32> to vector<1x16x8xf32>
    %101 = vector.broadcast %98 : vector<2x16x1xf32> to vector<2x16x8xf32>
    %102 = vector.broadcast %100 : vector<1x16x8xf32> to vector<2x16x8xf32>
    %103 = arith.mulf %101, %102 : vector<2x16x8xf32>
    %cst_42 = arith.constant dense<0.000000e+00> : vector<2x8xf32>
    %104 = vector.multi_reduction <add>, %103, %cst_42 [1] : vector<2x16x8xf32> to vector<2x8xf32>
    %c0_43 = arith.constant 0 : index
    %c0_44 = arith.constant 0 : index
    %105 = vector.load %arg9[%c0_43, %c0_44] : memref<1x8xf32, #tpu.memory_space<vmem>>, vector<1x8xf32>
    %106 = vector.broadcast %105 : vector<1x8xf32> to vector<2x8xf32>
    %107 = arith.addf %104, %106 : vector<2x8xf32>
    %c0_45 = arith.constant 0 : index
    %c0_46 = arith.constant 0 : index
    %108 = vector.load %arg10[%c0_45, %c0_46] : memref<2x8xf32, #tpu.memory_space<vmem>>, vector<2x8xf32>
    tpu.vector_store %arg10[%c0_45, %c0_46], %107 {strides = array<i32>} : memref<2x8xf32, #tpu.memory_space<vmem>>, vector<2x8xf32>,
    return
  }
  func.func @transform_0(%arg0: i32) -> (i32, i32, i32) {
    %c0_i32 = arith.constant 0 : i32
    %c0_i32_0 = arith.constant 0 : i32
    %c0_i32_1 = arith.constant 0 : i32
    %c0_i32_2 = arith.constant 0 : i32
    return %c0_i32, %c0_i32_0, %c0_i32_1 : i32, i32, i32
  }
  func.func @transform_1(%arg0: i32) -> (i32, i32, i32) {
    %c0_i32 = arith.constant 0 : i32
    %c0_i32_0 = arith.constant 0 : i32
    %c0_i32_1 = arith.constant 0 : i32
    %c0_i32_2 = arith.constant 0 : i32
    return %c0_i32, %c0_i32_0, %c0_i32_1 : i32, i32, i32
  }
  func.func @transform_2(%arg0: i32) -> (i32, i32) {
    %c0_i32 = arith.constant 0 : i32
    %c0_i32_0 = arith.constant 0 : i32
    %c0_i32_1 = arith.constant 0 : i32
    return %c0_i32, %c0_i32_0 : i32, i32
  }
  func.func @transform_3(%arg0: i32) -> (i32, i32) {
    %c0_i32 = arith.constant 0 : i32
    %c0_i32_0 = arith.constant 0 : i32
    %c0_i32_1 = arith.constant 0 : i32
    return %c0_i32, %c0_i32_0 : i32, i32
  }
  func.func @transform_4(%arg0: i32) -> (i32, i32) {
    %c0_i32 = arith.constant 0 : i32
    %c0_i32_0 = arith.constant 0 : i32
    %c0_i32_1 = arith.constant 0 : i32
    return %c0_i32, %c0_i32_0 : i32, i32
  }
  func.func @transform_5(%arg0: i32) -> (i32, i32) {
    %c0_i32 = arith.constant 0 : i32
    %c0_i32_0 = arith.constant 0 : i32
    %c0_i32_1 = arith.constant 0 : i32
    return %c0_i32, %c0_i32_0 : i32, i32
  }
  func.func @transform_6(%arg0: i32) -> (i32, i32) {
    %c0_i32 = arith.constant 0 : i32
    %c0_i32_0 = arith.constant 0 : i32
    %c0_i32_1 = arith.constant 0 : i32
    return %c0_i32, %c0_i32_0 : i32, i32
  }
  func.func @transform_7(%arg0: i32) -> (i32, i32) {
    %c0_i32 = arith.constant 0 : i32
    %c0_i32_0 = arith.constant 0 : i32
    %c0_i32_1 = arith.constant 0 : i32
    return %c0_i32, %c0_i32_0 : i32, i32
  }
  func.func @transform_8(%arg0: i32) -> (i32, i32) {
    %c0_i32 = arith.constant 0 : i32
    %c0_i32_0 = arith.constant 0 : i32
    %c0_i32_1 = arith.constant 0 : i32
    return %c0_i32, %c0_i32_0 : i32, i32
  }
  func.func @transform_9(%arg0: i32) -> (i32, i32) {
    %c0_i32 = arith.constant 0 : i32
    %c0_i32_0 = arith.constant 0 : i32
    %c0_i32_1 = arith.constant 0 : i32
    return %c0_i32, %c0_i32_0 : i32, i32
  }
}

</mosaic_0001>

<llo_original>
// kernel: _lambda_.1
$region0: #{_lambda_.1}
  #allocation0 [shape = 'u32[]', space=smem, size = 0x4, offset = 0x4, fixed_abs, tag = 'smem constant byte address 0x4 - core index']
  #allocation1 [shape = 'u32[144,128]{1,0:T(1,128)}', space=vmem, size = 0x12000, scoped, tag = 'internal scratch']
  #allocation2 [shape = 'f32[2,32,32]{2,1,0:T(8,128)}', space=vmem, size = 0x8000, scoped, tag = 'scratch operand']
  #allocation3 [shape = 'f32[1,1]{1,0:T(1,128)S(1)}', space=vmem, size = 0x200, scoped, tag = 'scoped memory for _lambda_.1']
  %s0 = inlined_call_operand.vmem [shape: f32[2,64,4], index: 0, kind: input, shape index: {}]
  %s1 = inlined_call_operand.vmem [shape: f32[2,16,64], index: 1, kind: input, shape index: {}]
  %s2 = inlined_call_operand.vmem [shape: f32[4,32], index: 2, kind: input, shape index: {}]
  %s3 = inlined_call_operand.vmem [shape: f32[1,32], index: 3, kind: input, shape index: {}]
  %s4 = inlined_call_operand.vmem [shape: f32[64,32], index: 4, kind: input, shape index: {}]
  %s5 = inlined_call_operand.vmem [shape: f32[5,32], index: 5, kind: input, shape index: {}]
  %s6 = inlined_call_operand.<no memory space> [shape: f32[1,1], index: 6, kind: input, shape index: {}]
  %s7 = inlined_call_operand.vmem [shape: f32[16,8], index: 7, kind: input, shape index: {}]
  %s8 = inlined_call_operand.vmem [shape: f32[1,8], index: 8, kind: input, shape index: {}]
  %s9 = inlined_call_operand.hbm [shape: f32[2,8], index: 9, kind: output, shape index: {}]
  %s10 = sld [smem:[#allocation0]]
  $region46: #{_lambda_.1} parent=0
    _
  %s12 = ssub.s32 1, %s10
  %s13 = scalar_select 0, %s12, %s10
  %v14 = vstv %s6
  %15 = vst [vmem:[#allocation3] sm:$0x1] %v14
  $region1: #{_lambda_.1} parent=0
    #allocation4 [shape = 'u8[1024]{0}', space=vmem, size = 0x400, scoped, tag = 'output window, operand 0, single buffered']
    #allocation5 [shape = 's32[1]{0}', space=sflag, size = 0x4, scoped, tag = 'scoped memory for _lambda_.1']
    %16 = vsyncpa [#allocation5], 0
    // Predicated region
    $region2: #{_lambda_.1} parent=1 // pred_check
      _
    $region3: #{_lambda_.1} parent=1 // pred_check_branch
      %18 = sbr.rel (0) target = $region5
    $region4: #{_lambda_.1} parent=1 // pred_region
      _
    $region5: #{_lambda_.1} parent=1 // pred_fallthru
      _
    // Predicated region
    $region6: #{_lambda_.1} parent=1 // pred_check
      _
    $region7: #{_lambda_.1} parent=1 // pred_check_branch
      %20 = sbr.rel (0) target = $region9
    $region8: #{_lambda_.1} parent=1 // pred_region
      _
    $region9: #{_lambda_.1} parent=1 // pred_fallthru
      _
    // Predicated region
    $region10: #{_lambda_.1} parent=1 // pred_check
      _
    $region11: #{_lambda_.1} parent=1 // pred_check_branch
      %22 = sbr.rel (0) target = $region13
    $region12: #{_lambda_.1} parent=1 // pred_region
      _
    $region13: #{_lambda_.1} parent=1 // pred_fallthru
      _
    // Predicated region
    $region14: #{_lambda_.1} parent=1 // pred_check
      _
    $region15: #{_lambda_.1} parent=1 // pred_check_branch
      %24 = sbr.rel (0) target = $region17
    $region16: #{_lambda_.1} parent=1 // pred_region
      _
    $region17: #{_lambda_.1} parent=1 // pred_fallthru
      _
    // Predicated region
    $region18: #{_lambda_.1} parent=1 // pred_check
      _
    $region19: #{_lambda_.1} parent=1 // pred_check_branch
      %26 = sbr.rel (0) target = $region21
    $region20: #{_lambda_.1} parent=1 // pred_region
      _
    $region21: #{_lambda_.1} parent=1 // pred_fallthru
      _
    // Predicated region
    $region22: #{_lambda_.1} parent=1 // pred_check
      _
    $region23: #{_lambda_.1} parent=1 // pred_check_branch
      %28 = sbr.rel (0) target = $region25
    $region24: #{_lambda_.1} parent=1 // pred_region
      _
    $region25: #{_lambda_.1} parent=1 // pred_fallthru
      _
    // Predicated region
    $region26: #{_lambda_.1} parent=1 // pred_check
      _
    $region27: #{_lambda_.1} parent=1 // pred_check_branch
      %30 = sbr.rel (0) target = $region29
    $region28: #{_lambda_.1} parent=1 // pred_region
      _
    $region29: #{_lambda_.1} parent=1 // pred_fallthru
      _
    // Predicated region
    $region30: #{_lambda_.1} parent=1 // pred_check
      _
    $region31: #{_lambda_.1} parent=1 // pred_check_branch
      %32 = sbr.rel (0) target = $region33
    $region32: #{_lambda_.1} parent=1 // pred_region
      _
    $region33: #{_lambda_.1} parent=1 // pred_fallthru
      _
    // Predicated region
    $region34: #{_lambda_.1} parent=1 // pred_check
      _
    $region35: #{_lambda_.1} parent=1 // pred_check_branch
      %34 = sbr.rel (0) target = $region37
    $region36: #{_lambda_.1} parent=1 // pred_region
      _
    $region37: #{_lambda_.1} parent=1 // pred_fallthru
      _
    %v35 = vld [vmem:[%s0] sm:$0xff]
    %v36 = vld [vmem:[%s0 + $0x8] sm:$0xff]
    %v37 = vld [vmem:[%s0 + $0x10] sm:$0xff]
    %v38 = vld [vmem:[%s0 + $0x18] sm:$0xff]
    %v39 = vld [vmem:[%s0 + $0x20] sm:$0xff]
    %v40 = vld [vmem:[%s0 + $0x28] sm:$0xff]
    %v41 = vld [vmem:[%s0 + $0x30] sm:$0xff]
    %v42 = vld [vmem:[%s0 + $0x38] sm:$0xff]
    %v43 = vld [vmem:[%s0 + $0x40] sm:$0xff]
    %v44 = vld [vmem:[%s0 + $0x48] sm:$0xff]
    %v45 = vld [vmem:[%s0 + $0x50] sm:$0xff]
    %v46 = vld [vmem:[%s0 + $0x58] sm:$0xff]
    %v47 = vld [vmem:[%s0 + $0x60] sm:$0xff]
    %v48 = vld [vmem:[%s0 + $0x68] sm:$0xff]
    %v49 = vld [vmem:[%s0 + $0x70] sm:$0xff]
    %v50 = vld [vmem:[%s0 + $0x78] sm:$0xff]
    %v51 = vld [vmem:[%s2] sm:$0xf]
    %v52 = vld [vmem:[%s3] sm:$0x1]
    %v53 = vld [vmem:[%s4] sm:$0xff]
    %v54 = vld [vmem:[%s4 + $0x8] sm:$0xff]
    %v55 = vld [vmem:[%s4 + $0x10] sm:$0xff]
    %v56 = vld [vmem:[%s4 + $0x18] sm:$0xff]
    %v57 = vld [vmem:[%s4 + $0x20] sm:$0xff]
    %v58 = vld [vmem:[%s4 + $0x28] sm:$0xff]
    %v59 = vld [vmem:[%s4 + $0x30] sm:$0xff]
    %v60 = vld [vmem:[%s4 + $0x38] sm:$0xff]
    %v62 = vlaneseq
    %v63 = vshrl.u32 %v62, 7
    %v64 = vsub.s32 0, %v63
    %v65 = vrot.slane %v52, %v64
    %v67 = vadd.f32 %v65, %v53
    %v68 = vadd.f32 %v65, %v54
    %v69 = vadd.f32 %v65, %v55
    %v70 = vadd.f32 %v65, %v56
    %v71 = vadd.f32 %v65, %v57
    %v72 = vadd.f32 %v65, %v58
    %v73 = vadd.f32 %v65, %v59
    %v74 = vadd.f32 %v65, %v60
    %76 = vset.pattern.permute.xlu0 0
    %77 = vperm.xlu0 %76, %v35
    %v78 = vpop.permute.xlu0 %77
    %81 = vset.pattern.permute.xlu0 0
    %82 = vperm.xlu0 %81, %v36
    %v83 = vpop.permute.xlu0 %82
    %86 = vset.pattern.permute.xlu0 0
    %87 = vperm.xlu0 %86, %v37
    %v88 = vpop.permute.xlu0 %87
    %91 = vset.pattern.permute.xlu0 0
    %92 = vperm.xlu0 %91, %v38
    %v93 = vpop.permute.xlu0 %92
    %96 = vset.pattern.permute.xlu0 0
    %97 = vperm.xlu0 %96, %v39
    %v98 = vpop.permute.xlu0 %97
    %101 = vset.pattern.permute.xlu0 0
    %102 = vperm.xlu0 %101, %v40
    %v103 = vpop.permute.xlu0 %102
    %106 = vset.pattern.permute.xlu0 0
    %107 = vperm.xlu0 %106, %v41
    %v108 = vpop.permute.xlu0 %107
    %111 = vset.pattern.permute.xlu0 0
    %112 = vperm.xlu0 %111, %v42
    %v113 = vpop.permute.xlu0 %112
    %116 = vset.pattern.permute.xlu0 0
    %117 = vperm.xlu0 %116, %v43
    %v118 = vpop.permute.xlu0 %117
    %121 = vset.pattern.permute.xlu0 0
    %122 = vperm.xlu0 %121, %v44
    %v123 = vpop.permute.xlu0 %122
    %126 = vset.pattern.permute.xlu0 0
    %127 = vperm.xlu0 %126, %v45
    %v128 = vpop.permute.xlu0 %127
    %131 = vset.pattern.permute.xlu0 0
    %132 = vperm.xlu0 %131, %v46
    %v133 = vpop.permute.xlu0 %132
    %136 = vset.pattern.permute.xlu0 0
    %137 = vperm.xlu0 %136, %v47
    %v138 = vpop.permute.xlu0 %137
    %141 = vset.pattern.permute.xlu0 0
    %142 = vperm.xlu0 %141, %v48
    %v143 = vpop.permute.xlu0 %142
    %146 = vset.pattern.permute.xlu0 0
    %147 = vperm.xlu0 %146, %v49
    %v148 = vpop.permute.xlu0 %147
    %151 = vset.pattern.permute.xlu0 0
    %152 = vperm.xlu0 %151, %v50
    %v153 = vpop.permute.xlu0 %152
    %v155 = vlaneseq
    %v156 = vshrl.u32 %v155, 7
    %v157 = vsub.s32 0, %v156
    %v158 = vrot.slane %v51, %v157
    %v159 = vmul.f32 %v78, %v158
    %v160 = vmul.f32 %v83, %v158
    %v161 = vmul.f32 %v88, %v158
    %v162 = vmul.f32 %v93, %v158
    %v163 = vmul.f32 %v98, %v158
    %v164 = vmul.f32 %v103, %v158
    %v165 = vmul.f32 %v108, %v158
    %v166 = vmul.f32 %v113, %v158
    %v167 = vmul.f32 %v118, %v158
    %v168 = vmul.f32 %v123, %v158
    %v169 = vmul.f32 %v128, %v158
    %v170 = vmul.f32 %v133, %v158
    %v171 = vmul.f32 %v138, %v158
    %v172 = vmul.f32 %v143, %v158
    %v173 = vmul.f32 %v148, %v158
    %v174 = vmul.f32 %v153, %v158
    %v175 = vadd.f32 %v67, %v159
    %v176 = vadd.f32 %v68, %v160
    %v177 = vadd.f32 %v69, %v161
    %v178 = vadd.f32 %v70, %v162
    %v179 = vadd.f32 %v71, %v163
    %v180 = vadd.f32 %v72, %v164
    %v181 = vadd.f32 %v73, %v165
    %v182 = vadd.f32 %v74, %v166
    %v183 = vadd.f32 %v67, %v167
    %v184 = vadd.f32 %v68, %v168
    %v185 = vadd.f32 %v69, %v169
    %v186 = vadd.f32 %v70, %v170
    %v187 = vadd.f32 %v71, %v171
    %v188 = vadd.f32 %v72, %v172
    %v189 = vadd.f32 %v73, %v173
    %v190 = vadd.f32 %v74, %v174
    %191 = vset.pattern.permute.xlu0 1
    %192 = vperm.xlu0 %191, %v35
    %v193 = vpop.permute.xlu0 %192
    %195 = vset.pattern.permute.xlu0 1
    %196 = vperm.xlu0 %195, %v36
    %v197 = vpop.permute.xlu0 %196
    %199 = vset.pattern.permute.xlu0 1
    %200 = vperm.xlu0 %199, %v37
    %v201 = vpop.permute.xlu0 %200
    %203 = vset.pattern.permute.xlu0 1
    %204 = vperm.xlu0 %203, %v38
    %v205 = vpop.permute.xlu0 %204
    %207 = vset.pattern.permute.xlu0 1
    %208 = vperm.xlu0 %207, %v39
    %v209 = vpop.permute.xlu0 %208
    %211 = vset.pattern.permute.xlu0 1
    %212 = vperm.xlu0 %211, %v40
    %v213 = vpop.permute.xlu0 %212
    %215 = vset.pattern.permute.xlu0 1
    %216 = vperm.xlu0 %215, %v41
    %v217 = vpop.permute.xlu0 %216
    %219 = vset.pattern.permute.xlu0 1
    %220 = vperm.xlu0 %219, %v42
    %v221 = vpop.permute.xlu0 %220
    %223 = vset.pattern.permute.xlu0 1
    %224 = vperm.xlu0 %223, %v43
    %v225 = vpop.permute.xlu0 %224
    %227 = vset.pattern.permute.xlu0 1
    %228 = vperm.xlu0 %227, %v44
    %v229 = vpop.permute.xlu0 %228
    %231 = vset.pattern.permute.xlu0 1
    %232 = vperm.xlu0 %231, %v45
    %v233 = vpop.permute.xlu0 %232
    %235 = vset.pattern.permute.xlu0 1
    %236 = vperm.xlu0 %235, %v46
    %v237 = vpop.permute.xlu0 %236
    %239 = vset.pattern.permute.xlu0 1
    %240 = vperm.xlu0 %239, %v47
    %v241 = vpop.permute.xlu0 %240
    %243 = vset.pattern.permute.xlu0 1
    %244 = vperm.xlu0 %243, %v48
    %v245 = vpop.permute.xlu0 %244
    %247 = vset.pattern.permute.xlu0 1
    %248 = vperm.xlu0 %247, %v49
    %v249 = vpop.permute.xlu0 %248
    %251 = vset.pattern.permute.xlu0 1
    %252 = vperm.xlu0 %251, %v50
    %v253 = vpop.permute.xlu0 %252
    %v255 = vlaneseq
    %v256 = vshrl.u32 %v255, 7
    %v257 = vsub.s32 1, %v256
    %v258 = vrot.slane %v51, %v257
    %v259 = vmul.f32 %v193, %v258
    %v260 = vmul.f32 %v197, %v258
    %v261 = vmul.f32 %v201, %v258
    %v262 = vmul.f32 %v205, %v258
    %v263 = vmul.f32 %v209, %v258
    %v264 = vmul.f32 %v213, %v258
    %v265 = vmul.f32 %v217, %v258
    %v266 = vmul.f32 %v221, %v258
    %v267 = vmul.f32 %v225, %v258
    %v268 = vmul.f32 %v229, %v258
    %v269 = vmul.f32 %v233, %v258
    %v270 = vmul.f32 %v237, %v258
    %v271 = vmul.f32 %v241, %v258
    %v272 = vmul.f32 %v245, %v258
    %v273 = vmul.f32 %v249, %v258
    %v274 = vmul.f32 %v253, %v258
    %v275 = vadd.f32 %v175, %v259
    %v276 = vadd.f32 %v176, %v260
    %v277 = vadd.f32 %v177, %v261
    %v278 = vadd.f32 %v178, %v262
    %v279 = vadd.f32 %v179, %v263
    %v280 = vadd.f32 %v180, %v264
    %v281 = vadd.f32 %v181, %v265
    %v282 = vadd.f32 %v182, %v266
    %v283 = vadd.f32 %v183, %v267
    %v284 = vadd.f32 %v184, %v268
    %v285 = vadd.f32 %v185, %v269
    %v286 = vadd.f32 %v186, %v270
    %v287 = vadd.f32 %v187, %v271
    %v288 = vadd.f32 %v188, %v272
    %v289 = vadd.f32 %v189, %v273
    %v290 = vadd.f32 %v190, %v274
    %291 = vset.pattern.permute.xlu0 2
    %292 = vperm.xlu0 %291, %v35
    %v293 = vpop.permute.xlu0 %292
    %295 = vset.pattern.permute.xlu0 2
    %296 = vperm.xlu0 %295, %v36
    %v297 = vpop.permute.xlu0 %296
    %299 = vset.pattern.permute.xlu0 2
    %300 = vperm.xlu0 %299, %v37
    %v301 = vpop.permute.xlu0 %300
    %303 = vset.pattern.permute.xlu0 2
    %304 = vperm.xlu0 %303, %v38
    %v305 = vpop.permute.xlu0 %304
    %307 = vset.pattern.permute.xlu0 2
    %308 = vperm.xlu0 %307, %v39
    %v309 = vpop.permute.xlu0 %308
    %311 = vset.pattern.permute.xlu0 2
    %312 = vperm.xlu0 %311, %v40
    %v313 = vpop.permute.xlu0 %312
    %315 = vset.pattern.permute.xlu0 2
    %316 = vperm.xlu0 %315, %v41
    %v317 = vpop.permute.xlu0 %316
    %319 = vset.pattern.permute.xlu0 2
    %320 = vperm.xlu0 %319, %v42
    %v321 = vpop.permute.xlu0 %320
    %323 = vset.pattern.permute.xlu0 2
    %324 = vperm.xlu0 %323, %v43
    %v325 = vpop.permute.xlu0 %324
    %327 = vset.pattern.permute.xlu0 2
    %328 = vperm.xlu0 %327, %v44
    %v329 = vpop.permute.xlu0 %328
    %331 = vset.pattern.permute.xlu0 2
    %332 = vperm.xlu0 %331, %v45
    %v333 = vpop.permute.xlu0 %332
    %335 = vset.pattern.permute.xlu0 2
    %336 = vperm.xlu0 %335, %v46
    %v337 = vpop.permute.xlu0 %336
    %339 = vset.pattern.permute.xlu0 2
    %340 = vperm.xlu0 %339, %v47
    %v341 = vpop.permute.xlu0 %340
    %343 = vset.pattern.permute.xlu0 2
    %344 = vperm.xlu0 %343, %v48
    %v345 = vpop.permute.xlu0 %344
    %347 = vset.pattern.permute.xlu0 2
    %348 = vperm.xlu0 %347, %v49
    %v349 = vpop.permute.xlu0 %348
    %351 = vset.pattern.permute.xlu0 2
    %352 = vperm.xlu0 %351, %v50
    %v353 = vpop.permute.xlu0 %352
    %v355 = vlaneseq
    %v356 = vshrl.u32 %v355, 7
    %v357 = vsub.s32 2, %v356
    %v358 = vrot.slane %v51, %v357
    %v359 = vmul.f32 %v293, %v358
    %v360 = vmul.f32 %v297, %v358
    %v361 = vmul.f32 %v301, %v358
    %v362 = vmul.f32 %v305, %v358
    %v363 = vmul.f32 %v309, %v358
    %v364 = vmul.f32 %v313, %v358
    %v365 = vmul.f32 %v317, %v358
    %v366 = vmul.f32 %v321, %v358
    %v367 = vmul.f32 %v325, %v358
    %v368 = vmul.f32 %v329, %v358
    %v369 = vmul.f32 %v333, %v358
    %v370 = vmul.f32 %v337, %v358
    %v371 = vmul.f32 %v341, %v358
    %v372 = vmul.f32 %v345, %v358
    %v373 = vmul.f32 %v349, %v358
    %v374 = vmul.f32 %v353, %v358
    %v375 = vadd.f32 %v275, %v359
    %v376 = vadd.f32 %v276, %v360
    %v377 = vadd.f32 %v277, %v361
    %v378 = vadd.f32 %v278, %v362
    %v379 = vadd.f32 %v279, %v363
    %v380 = vadd.f32 %v280, %v364
    %v381 = vadd.f32 %v281, %v365
    %v382 = vadd.f32 %v282, %v366
    %v383 = vadd.f32 %v283, %v367
    %v384 = vadd.f32 %v284, %v368
    %v385 = vadd.f32 %v285, %v369
    %v386 = vadd.f32 %v286, %v370
    %v387 = vadd.f32 %v287, %v371
    %v388 = vadd.f32 %v288, %v372
    %v389 = vadd.f32 %v289, %v373
    %v390 = vadd.f32 %v290, %v374
    %391 = vset.pattern.permute.xlu0 3
    %392 = vperm.xlu0 %391, %v35
    %v393 = vpop.permute.xlu0 %392
    %395 = vset.pattern.permute.xlu0 3
    %396 = vperm.xlu0 %395, %v36
    %v397 = vpop.permute.xlu0 %396
    %399 = vset.pattern.permute.xlu0 3
    %400 = vperm.xlu0 %399, %v37
    %v401 = vpop.permute.xlu0 %400
    %403 = vset.pattern.permute.xlu0 3
    %404 = vperm.xlu0 %403, %v38
    %v405 = vpop.permute.xlu0 %404
    %407 = vset.pattern.permute.xlu0 3
    %408 = vperm.xlu0 %407, %v39
    %v409 = vpop.permute.xlu0 %408
    %411 = vset.pattern.permute.xlu0 3
    %412 = vperm.xlu0 %411, %v40
    %v413 = vpop.permute.xlu0 %412
    %415 = vset.pattern.permute.xlu0 3
    %416 = vperm.xlu0 %415, %v41
    %v417 = vpop.permute.xlu0 %416
    %419 = vset.pattern.permute.xlu0 3
    %420 = vperm.xlu0 %419, %v42
    %v421 = vpop.permute.xlu0 %420
    %423 = vset.pattern.permute.xlu0 3
    %424 = vperm.xlu0 %423, %v43
    %v425 = vpop.permute.xlu0 %424
    %427 = vset.pattern.permute.xlu0 3
    %428 = vperm.xlu0 %427, %v44
    %v429 = vpop.permute.xlu0 %428
    %431 = vset.pattern.permute.xlu0 3
    %432 = vperm.xlu0 %431, %v45
    %v433 = vpop.permute.xlu0 %432
    %435 = vset.pattern.permute.xlu0 3
    %436 = vperm.xlu0 %435, %v46
    %v437 = vpop.permute.xlu0 %436
    %439 = vset.pattern.permute.xlu0 3
    %440 = vperm.xlu0 %439, %v47
    %v441 = vpop.permute.xlu0 %440
    %443 = vset.pattern.permute.xlu0 3
    %444 = vperm.xlu0 %443, %v48
    %v445 = vpop.permute.xlu0 %444
    %447 = vset.pattern.permute.xlu0 3
    %448 = vperm.xlu0 %447, %v49
    %v449 = vpop.permute.xlu0 %448
    %451 = vset.pattern.permute.xlu0 3
    %452 = vperm.xlu0 %451, %v50
    %v453 = vpop.permute.xlu0 %452
    %v455 = vlaneseq
    %v456 = vshrl.u32 %v455, 7
    %v457 = vsub.s32 3, %v456
    %v458 = vrot.slane %v51, %v457
    %v459 = vmul.f32 %v393, %v458
    %v460 = vmul.f32 %v397, %v458
    %v461 = vmul.f32 %v401, %v458
    %v462 = vmul.f32 %v405, %v458
    %v463 = vmul.f32 %v409, %v458
    %v464 = vmul.f32 %v413, %v458
    %v465 = vmul.f32 %v417, %v458
    %v466 = vmul.f32 %v421, %v458
    %v467 = vmul.f32 %v425, %v458
    %v468 = vmul.f32 %v429, %v458
    %v469 = vmul.f32 %v433, %v458
    %v470 = vmul.f32 %v437, %v458
    %v471 = vmul.f32 %v441, %v458
    %v472 = vmul.f32 %v445, %v458
    %v473 = vmul.f32 %v449, %v458
    %v474 = vmul.f32 %v453, %v458
    %v475 = vadd.f32 %v375, %v459
    %v476 = vadd.f32 %v376, %v460
    %v477 = vadd.f32 %v377, %v461
    %v478 = vadd.f32 %v378, %v462
    %v479 = vadd.f32 %v379, %v463
    %v480 = vadd.f32 %v380, %v464
    %v481 = vadd.f32 %v381, %v465
    %v482 = vadd.f32 %v382, %v466
    %v483 = vadd.f32 %v383, %v467
    %v484 = vadd.f32 %v384, %v468
    %v485 = vadd.f32 %v385, %v469
    %v486 = vadd.f32 %v386, %v470
    %v487 = vadd.f32 %v387, %v471
    %v488 = vadd.f32 %v388, %v472
    %v489 = vadd.f32 %v389, %v473
    %v490 = vadd.f32 %v390, %v474
    %v491 = vmul.f32 %v475, 0.5
    %v492 = vmul.f32 %v476, 0.5
    %v493 = vmul.f32 %v477, 0.5
    %v494 = vmul.f32 %v478, 0.5
    %v495 = vmul.f32 %v479, 0.5
    %v496 = vmul.f32 %v480, 0.5
    %v497 = vmul.f32 %v481, 0.5
    %v498 = vmul.f32 %v482, 0.5
    %v499 = vmul.f32 %v483, 0.5
    %v500 = vmul.f32 %v484, 0.5
    %v501 = vmul.f32 %v485, 0.5
    %v502 = vmul.f32 %v486, 0.5
    %v503 = vmul.f32 %v487, 0.5
    %v504 = vmul.f32 %v488, 0.5
    %v505 = vmul.f32 %v489, 0.5
    %v506 = vmul.f32 %v490, 0.5
    %v507 = vmul.f32 %v475, 0.044715
    %v508 = vmul.f32 %v476, 0.044715
    %v509 = vmul.f32 %v477, 0.044715
    %v510 = vmul.f32 %v478, 0.044715
    %v511 = vmul.f32 %v479, 0.044715
    %v512 = vmul.f32 %v480, 0.044715
    %v513 = vmul.f32 %v481, 0.044715
    %v514 = vmul.f32 %v482, 0.044715
    %v515 = vmul.f32 %v483, 0.044715
    %v516 = vmul.f32 %v484, 0.044715
    %v517 = vmul.f32 %v485, 0.044715
    %v518 = vmul.f32 %v486, 0.044715
    %v519 = vmul.f32 %v487, 0.044715
    %v520 = vmul.f32 %v488, 0.044715
    %v521 = vmul.f32 %v489, 0.044715
    %v522 = vmul.f32 %v490, 0.044715
    %v523 = vmul.f32 %v507, %v475
    %v524 = vmul.f32 %v508, %v476
    %v525 = vmul.f32 %v509, %v477
    %v526 = vmul.f32 %v510, %v478
    %v527 = vmul.f32 %v511, %v479
    %v528 = vmul.f32 %v512, %v480
    %v529 = vmul.f32 %v513, %v481
    %v530 = vmul.f32 %v514, %v482
    %v531 = vmul.f32 %v515, %v483
    %v532 = vmul.f32 %v516, %v484
    %v533 = vmul.f32 %v517, %v485
    %v534 = vmul.f32 %v518, %v486
    %v535 = vmul.f32 %v519, %v487
    %v536 = vmul.f32 %v520, %v488
    %v537 = vmul.f32 %v521, %v489
    %v538 = vmul.f32 %v522, %v490
    %v539 = vmul.f32 %v523, %v475
    %v540 = vmul.f32 %v524, %v476
    %v541 = vmul.f32 %v525, %v477
    %v542 = vmul.f32 %v526, %v478
    %v543 = vmul.f32 %v527, %v479
    %v544 = vmul.f32 %v528, %v480
    %v545 = vmul.f32 %v529, %v481
    %v546 = vmul.f32 %v530, %v482
    %v547 = vmul.f32 %v531, %v483
    %v548 = vmul.f32 %v532, %v484
    %v549 = vmul.f32 %v533, %v485
    %v550 = vmul.f32 %v534, %v486
    %v551 = vmul.f32 %v535, %v487
    %v552 = vmul.f32 %v536, %v488
    %v553 = vmul.f32 %v537, %v489
    %v554 = vmul.f32 %v538, %v490
    %v555 = vadd.f32 %v475, %v539
    %v556 = vadd.f32 %v476, %v540
    %v557 = vadd.f32 %v477, %v541
    %v558 = vadd.f32 %v478, %v542
    %v559 = vadd.f32 %v479, %v543
    %v560 = vadd.f32 %v480, %v544
    %v561 = vadd.f32 %v481, %v545
    %v562 = vadd.f32 %v482, %v546
    %v563 = vadd.f32 %v483, %v547
    %v564 = vadd.f32 %v484, %v548
    %v565 = vadd.f32 %v485, %v549
    %v566 = vadd.f32 %v486, %v550
    %v567 = vadd.f32 %v487, %v551
    %v568 = vadd.f32 %v488, %v552
    %v569 = vadd.f32 %v489, %v553
    %v570 = vadd.f32 %v490, %v554
    %v571 = vmul.f32 %v555, 0.7978846
    %v572 = vmul.f32 %v556, 0.7978846
    %v573 = vmul.f32 %v557, 0.7978846
    %v574 = vmul.f32 %v558, 0.7978846
    %v575 = vmul.f32 %v559, 0.7978846
    %v576 = vmul.f32 %v560, 0.7978846
    %v577 = vmul.f32 %v561, 0.7978846
    %v578 = vmul.f32 %v562, 0.7978846
    %v579 = vmul.f32 %v563, 0.7978846
    %v580 = vmul.f32 %v564, 0.7978846
    %v581 = vmul.f32 %v565, 0.7978846
    %v582 = vmul.f32 %v566, 0.7978846
    %v583 = vmul.f32 %v567, 0.7978846
    %v584 = vmul.f32 %v568, 0.7978846
    %v585 = vmul.f32 %v569, 0.7978846
    %v586 = vmul.f32 %v570, 0.7978846
    %v587 = vtanh.pop %v571
    %v588 = vtanh.pop %v572
    %v589 = vtanh.pop %v573
    %v590 = vtanh.pop %v574
    %v591 = vtanh.pop %v575
    %v592 = vtanh.pop %v576
    %v593 = vtanh.pop %v577
    %v594 = vtanh.pop %v578
    %v595 = vtanh.pop %v579
    %v596 = vtanh.pop %v580
    %v597 = vtanh.pop %v581
    %v598 = vtanh.pop %v582
    %v599 = vtanh.pop %v583
    %v600 = vtanh.pop %v584
    %v601 = vtanh.pop %v585
    %v602 = vtanh.pop %v586
    %v603 = vadd.f32 %v587, 1.0
    %v604 = vadd.f32 %v588, 1.0
    %v605 = vadd.f32 %v589, 1.0
    %v606 = vadd.f32 %v590, 1.0
    %v607 = vadd.f32 %v591, 1.0
    %v608 = vadd.f32 %v592, 1.0
    %v609 = vadd.f32 %v593, 1.0
    %v610 = vadd.f32 %v594, 1.0
    %v611 = vadd.f32 %v595, 1.0
    %v612 = vadd.f32 %v596, 1.0
    %v613 = vadd.f32 %v597, 1.0
    %v614 = vadd.f32 %v598, 1.0
    %v615 = vadd.f32 %v599, 1.0
    %v616 = vadd.f32 %v600, 1.0
    %v617 = vadd.f32 %v601, 1.0
    %v618 = vadd.f32 %v602, 1.0
    %v619 = vmul.f32 %v491, %v603
    %v620 = vmul.f32 %v492, %v604
    %v621 = vmul.f32 %v493, %v605
    %v622 = vmul.f32 %v494, %v606
    %v623 = vmul.f32 %v495, %v607
    %v624 = vmul.f32 %v496, %v608
    %v625 = vmul.f32 %v497, %v609
    %v626 = vmul.f32 %v498, %v610
    %v627 = vmul.f32 %v499, %v611
    %v628 = vmul.f32 %v500, %v612
    %v629 = vmul.f32 %v501, %v613
    %v630 = vmul.f32 %v502, %v614
    %v631 = vmul.f32 %v503, %v615
    %v632 = vmul.f32 %v504, %v616
    %v633 = vmul.f32 %v505, %v617
    %v634 = vmul.f32 %v506, %v618
    %v635 = vld [vmem:[%s1] sm:$0xff]
    %v636 = vld [vmem:[%s1 + $0x8] sm:$0xff]
    %v637 = vld [vmem:[%s1 + $0x10] sm:$0xff]
    %v638 = vld [vmem:[%s1 + $0x18] sm:$0xff]
    %vm639 = vcmask 523264
    %v641 = vsel %vm639, %v635, 0
    %v644 = vsel %vm639, %v636, 0
    %646 = vmatprep.subr.mxu0 0.0
    %647 = vmatpush1.msra.mxu0 0.0
    %648 = vmatprep.subr.mxu0 0.0
    %649 = vmatpush1.msra.mxu0 0.0
    %650 = vmatprep.subr.mxu0 0.0
    %651 = vmatpush1.msra.mxu0 0.0
    %652 = vmatprep.subr.mxu0 0.0
    %653 = vmatpush1.msra.mxu0 0.0
    %654 = vmatprep.subr.mxu0 0.0
    %655 = vmatpush1.msra.mxu0 0.0
    %656 = vmatprep.subr.mxu0 0.0
    %657 = vmatpush1.msra.mxu0 0.0
    %658 = vmatprep.subr.mxu0 0.0
    %659 = vmatpush1.msra.mxu0 0.0
    %660 = vmatprep.subr.mxu0 0.0
    %661 = vmatpush1.msra.mxu0 0.0
    %662 = vmatprep.subr.mxu0 0.0
    %663 = vmatpush1.msra.mxu0 %v626
    %664 = vmatprep.subr.mxu0 0.0
    %665 = vmatpush1.msra.mxu0 %v625
    %666 = vmatprep.subr.mxu0 0.0
    %667 = vmatpush1.msra.mxu0 %v624
    %668 = vmatprep.subr.mxu0 0.0
    %669 = vmatpush1.msra.mxu0 %v623
    %670 = vmatprep.subr.mxu0 0.0
    %671 = vmatpush1.msra.mxu0 %v622
    %672 = vmatprep.subr.mxu0 0.0
    %673 = vmatpush1.msra.mxu0 %v621
    %674 = vmatprep.subr.mxu0 0.0
    %675 = vmatpush1.msra.mxu0 %v620
    %676 = vmatprep.subr.mxu0 0.0
    %677 = vmatpush1.msra.mxu0 %v619
    %678 = vmatprep.subr.mxu0 0.0
    %679 = vmatpush2.msra.mxu0 0.0
    %680 = vmatprep.subr.mxu0 0.0
    %681 = vmatpush2.msra.mxu0 0.0
    %682 = vmatprep.subr.mxu0 0.0
    %683 = vmatpush2.msra.mxu0 0.0
    %684 = vmatprep.subr.mxu0 0.0
    %685 = vmatpush2.msra.mxu0 0.0
    %686 = vmatprep.subr.mxu0 0.0
    %687 = vmatpush2.msra.mxu0 0.0
    %688 = vmatprep.subr.mxu0 0.0
    %689 = vmatpush2.msra.mxu0 0.0
    %690 = vmatprep.subr.mxu0 0.0
    %691 = vmatpush2.msra.mxu0 0.0
    %692 = vmatprep.subr.mxu0 0.0
    %693 = vmatpush2.msra.mxu0 0.0
    %694 = vmatprep.subr.mxu0 0.0
    %695 = vmatpush2.msra.mxu0 0.0
    %696 = vmatprep.subr.mxu0 0.0
    %697 = vmatpush2.msra.mxu0 0.0
    %698 = vmatprep.subr.mxu0 0.0
    %699 = vmatpush2.msra.mxu0 0.0
    %700 = vmatprep.subr.mxu0 0.0
    %701 = vmatpush2.msra.mxu0 0.0
    %702 = vmatprep.subr.mxu0 0.0
    %703 = vmatpush2.msra.mxu0 0.0
    %704 = vmatprep.subr.mxu0 0.0
    %705 = vmatpush2.msra.mxu0 0.0
    %706 = vmatprep.subr.mxu0 0.0
    %707 = vmatpush2.msra.mxu0 0.0
    %708 = vmatprep.subr.mxu0 0.0
    %709 = vmatpush2.msra.mxu0 0.0
    %710 = vmatprep.mubr.f32.mxu0 0.0
    %711 = vmatmul.mubr.f32.gmra.mxu0 %v641
    %v712 = vpop.f32.mrf.mxu0
    %v713 = vadd.f32 0.0, %v712
    %v714 = vpop.f32.mrf.mxu0
    %715 = vmatprep.mubr.f32.mxu0 0.0
    %716 = vmatmul.mubr.f32.gmra.mxu0 %v644
    %v717 = vpop.f32.mrf.mxu0
    %v718 = vadd.f32 0.0, %v717
    %v719 = vpop.f32.mrf.mxu0
    %720 = vdwg.mxu0
    %v722 = vsel %vm639, %v637, 0
    %v725 = vsel %vm639, %v638, 0
    %727 = vmatprep.subr.mxu0 0.0
    %728 = vmatpush1.msra.mxu0 0.0
    %729 = vmatprep.subr.mxu0 0.0
    %730 = vmatpush1.msra.mxu0 0.0
    %731 = vmatprep.subr.mxu0 0.0
    %732 = vmatpush1.msra.mxu0 0.0
    %733 = vmatprep.subr.mxu0 0.0
    %734 = vmatpush1.msra.mxu0 0.0
    %735 = vmatprep.subr.mxu0 0.0
    %736 = vmatpush1.msra.mxu0 0.0
    %737 = vmatprep.subr.mxu0 0.0
    %738 = vmatpush1.msra.mxu0 0.0
    %739 = vmatprep.subr.mxu0 0.0
    %740 = vmatpush1.msra.mxu0 0.0
    %741 = vmatprep.subr.mxu0 0.0
    %742 = vmatpush1.msra.mxu0 0.0
    %743 = vmatprep.subr.mxu0 0.0
    %744 = vmatpush1.msra.mxu0 %v634
    %745 = vmatprep.subr.mxu0 0.0
    %746 = vmatpush1.msra.mxu0 %v633
    %747 = vmatprep.subr.mxu0 0.0
    %748 = vmatpush1.msra.mxu0 %v632
    %749 = vmatprep.subr.mxu0 0.0
    %750 = vmatpush1.msra.mxu0 %v631
    %751 = vmatprep.subr.mxu0 0.0
    %752 = vmatpush1.msra.mxu0 %v630
    %753 = vmatprep.subr.mxu0 0.0
    %754 = vmatpush1.msra.mxu0 %v629
    %755 = vmatprep.subr.mxu0 0.0
    %756 = vmatpush1.msra.mxu0 %v628
    %757 = vmatprep.subr.mxu0 0.0
    %758 = vmatpush1.msra.mxu0 %v627
    %759 = vmatprep.subr.mxu0 0.0
    %760 = vmatpush2.msra.mxu0 0.0
    %761 = vmatprep.subr.mxu0 0.0
    %762 = vmatpush2.msra.mxu0 0.0
    %763 = vmatprep.subr.mxu0 0.0
    %764 = vmatpush2.msra.mxu0 0.0
    %765 = vmatprep.subr.mxu0 0.0
    %766 = vmatpush2.msra.mxu0 0.0
    %767 = vmatprep.subr.mxu0 0.0
    %768 = vmatpush2.msra.mxu0 0.0
    %769 = vmatprep.subr.mxu0 0.0
    %770 = vmatpush2.msra.mxu0 0.0
    %771 = vmatprep.subr.mxu0 0.0
    %772 = vmatpush2.msra.mxu0 0.0
    %773 = vmatprep.subr.mxu0 0.0
    %774 = vmatpush2.msra.mxu0 0.0
    %775 = vmatprep.subr.mxu0 0.0
    %776 = vmatpush2.msra.mxu0 0.0
    %777 = vmatprep.subr.mxu0 0.0
    %778 = vmatpush2.msra.mxu0 0.0
    %779 = vmatprep.subr.mxu0 0.0
    %780 = vmatpush2.msra.mxu0 0.0
    %781 = vmatprep.subr.mxu0 0.0
    %782 = vmatpush2.msra.mxu0 0.0
    %783 = vmatprep.subr.mxu0 0.0
    %784 = vmatpush2.msra.mxu0 0.0
    %785 = vmatprep.subr.mxu0 0.0
    %786 = vmatpush2.msra.mxu0 0.0
    %787 = vmatprep.subr.mxu0 0.0
    %788 = vmatpush2.msra.mxu0 0.0
    %789 = vmatprep.subr.mxu0 0.0
    %790 = vmatpush2.msra.mxu0 0.0
    %791 = vmatprep.mubr.f32.mxu0 0.0
    %792 = vmatmul.mubr.f32.gmra.mxu0 %v722
    %v793 = vpop.f32.mrf.mxu0
    %v794 = vadd.f32 0.0, %v793
    %v795 = vpop.f32.mrf.mxu0
    %796 = vmatprep.mubr.f32.mxu0 0.0
    %797 = vmatmul.mubr.f32.gmra.mxu0 %v725
    %v798 = vpop.f32.mrf.mxu0
    %v799 = vadd.f32 0.0, %v798
    %v800 = vpop.f32.mrf.mxu0
    %801 = vdwg.mxu0
    %v802 = vsel %vm639, %v635, 0.0
    %803 = vadd.xlane.f32.xlu0 %v802
    %v804 = vpop.xlane.xlu0 %803
    %v805 = vsel %vm639, %v636, 0.0
    %806 = vadd.xlane.f32.xlu0 %v805
    %v807 = vpop.xlane.xlu0 %806
    %v808 = vsel %vm639, %v637, 0.0
    %809 = vadd.xlane.f32.xlu0 %v808
    %v810 = vpop.xlane.xlu0 %809
    %v811 = vsel %vm639, %v638, 0.0
    %812 = vadd.xlane.f32.xlu0 %v811
    %v813 = vpop.xlane.xlu0 %812
    %v814 = vadd.f32 %v804, 1e-06
    %v815 = vadd.f32 %v807, 1e-06
    %v816 = vadd.f32 %v810, 1e-06
    %v817 = vadd.f32 %v813, 1e-06
    %v818 = vrcp.pop %v814
    %v819 = vrcp.pop %v815
    %v820 = vrcp.pop %v816
    %v821 = vrcp.pop %v817
    %v822 = vmul.f32 %v713, %v818
    %v823 = vmul.f32 %v718, %v819
    %v824 = vmul.f32 %v794, %v820
    %v825 = vmul.f32 %v799, %v821
    %vm826 = vcmask 261120
    %827 = vst.msk [vmem:[#allocation2] sm:$0xff] %vm826, 0.0
    %828 = vst.msk [vmem:[#allocation2 + $0x8] sm:$0xff] %vm826, 0.0
    %829 = vst.msk [vmem:[#allocation2 + $0x10] sm:$0xff] %vm826, 0.0
    %830 = vst.msk [vmem:[#allocation2 + $0x18] sm:$0xff] %vm826, 0.0
    %831 = vst.msk [vmem:[#allocation2 + $0x20] sm:$0xff] %vm826, 0.0
    %832 = vst.msk [vmem:[#allocation2 + $0x28] sm:$0xff] %vm826, 0.0
    %833 = vst.msk [vmem:[#allocation2 + $0x30] sm:$0xff] %vm826, 0.0
    %834 = vst.msk [vmem:[#allocation2 + $0x38] sm:$0xff] %vm826, 0.0
    %835 = vst.msk [vmem:[#allocation2 + $0x8] sm:$0xff] %vm826, %v822
    %836 = vst.msk [vmem:[#allocation2 + $0x10] sm:$0xff] %vm826, %v823
    %837 = vst.msk [vmem:[#allocation2 + $0x28] sm:$0xff] %vm826, %v824
    %838 = vst.msk [vmem:[#allocation2 + $0x30] sm:$0xff] %vm826, %v825
    %v839 = vld [vmem:[%s5] sm:$0x1f]
    %v840 = vld [vmem:[#allocation2 + $0x6] sm:$0xff]
    %v841 = vld [vmem:[#allocation2 + $0xe] sm:$0xff]
    %v842 = vld [vmem:[#allocation2 + $0x26] sm:$0xff]
    %v843 = vld [vmem:[#allocation2 + $0x2e] sm:$0xff]
    %v844 = vlaneseq
    %v845 = vshrl.u32 %v844, 7
    %v846 = vsub.s32 0, %v845
    %v847 = vrot.slane %v839, %v846
    %v848 = vmul.f32 %v840, %v847
    %v849 = vmul.f32 %v841, %v847
    %v850 = vmul.f32 %v842, %v847
    %v851 = vmul.f32 %v843, %v847
    %v852 = vld [vmem:[#allocation2 + $0x7] sm:$0xff]
    %v853 = vld [vmem:[#allocation2 + $0xf] sm:$0xff]
    %v854 = vld [vmem:[#allocation2 + $0x27] sm:$0xff]
    %v855 = vld [vmem:[#allocation2 + $0x2f] sm:$0xff]
    %v856 = vlaneseq
    %v857 = vshrl.u32 %v856, 7
    %v858 = vsub.s32 1, %v857
    %v859 = vrot.slane %v839, %v858
    %v860 = vmul.f32 %v852, %v859
    %v861 = vmul.f32 %v853, %v859
    %v862 = vmul.f32 %v854, %v859
    %v863 = vmul.f32 %v855, %v859
    %v864 = vadd.f32 %v848, %v860
    %v865 = vadd.f32 %v849, %v861
    %v866 = vadd.f32 %v850, %v862
    %v867 = vadd.f32 %v851, %v863
    %v868 = vld [vmem:[#allocation2 + $0x8] sm:$0xff]
    %v869 = vld [vmem:[#allocation2 + $0x10] sm:$0xff]
    %v870 = vld [vmem:[#allocation2 + $0x28] sm:$0xff]
    %v871 = vld [vmem:[#allocation2 + $0x30] sm:$0xff]
    %v872 = vlaneseq
    %v873 = vshrl.u32 %v872, 7
    %v874 = vsub.s32 2, %v873
    %v875 = vrot.slane %v839, %v874
    %v876 = vmul.f32 %v868, %v875
    %v877 = vmul.f32 %v869, %v875
    %v878 = vmul.f32 %v870, %v875
    %v879 = vmul.f32 %v871, %v875
    %v880 = vadd.f32 %v864, %v876
    %v881 = vadd.f32 %v865, %v877
    %v882 = vadd.f32 %v866, %v878
    %v883 = vadd.f32 %v867, %v879
    %v884 = vld [vmem:[#allocation2 + $0x9] sm:$0xff]
    %v885 = vld [vmem:[#allocation2 + $0x11] sm:$0xff]
    %v886 = vld [vmem:[#allocation2 + $0x29] sm:$0xff]
    %v887 = vld [vmem:[#allocation2 + $0x31] sm:$0xff]
    %v888 = vlaneseq
    %v889 = vshrl.u32 %v888, 7
    %v890 = vsub.s32 3, %v889
    %v891 = vrot.slane %v839, %v890
    %v892 = vmul.f32 %v884, %v891
    %v893 = vmul.f32 %v885, %v891
    %v894 = vmul.f32 %v886, %v891
    %v895 = vmul.f32 %v887, %v891
    %v896 = vadd.f32 %v880, %v892
    %v897 = vadd.f32 %v881, %v893
    %v898 = vadd.f32 %v882, %v894
    %v899 = vadd.f32 %v883, %v895
    %v900 = vld [vmem:[#allocation2 + $0xa] sm:$0xff]
    %v901 = vld [vmem:[#allocation2 + $0x12] sm:$0xff]
    %v902 = vld [vmem:[#allocation2 + $0x2a] sm:$0xff]
    %v903 = vld [vmem:[#allocation2 + $0x32] sm:$0xff]
    %v904 = vlaneseq
    %v905 = vshrl.u32 %v904, 7
    %v906 = vsub.s32 4, %v905
    %v907 = vrot.slane %v839, %v906
    %v908 = vmul.f32 %v900, %v907
    %v909 = vmul.f32 %v901, %v907
    %v910 = vmul.f32 %v902, %v907
    %v911 = vmul.f32 %v903, %v907
    %v912 = vadd.f32 %v896, %v908
    %v913 = vadd.f32 %v897, %v909
    %v914 = vadd.f32 %v898, %v910
    %v915 = vadd.f32 %v899, %v911
    %v916 = vsel %vm826, %v912, 0.0
    %917 = vadd.xlane.f32.xlu0 %v916
    %v918 = vpop.xlane.xlu0 %917
    %v919 = vsel %vm826, %v913, 0.0
    %920 = vadd.xlane.f32.xlu0 %v919
    %v921 = vpop.xlane.xlu0 %920
    %v922 = vsel %vm826, %v914, 0.0
    %923 = vadd.xlane.f32.xlu0 %v922
    %v924 = vpop.xlane.xlu0 %923
    %v925 = vsel %vm826, %v915, 0.0
    %926 = vadd.xlane.f32.xlu0 %v925
    %v927 = vpop.xlane.xlu0 %926
    %v928 = vld [vmem:[#allocation3] sm:$0x1]
    %v930 = vlaneseq
    %v931 = vshrl.u32 %v930, 7
    %v932 = vsub.s32 0, %v931
    %v933 = vrot.slane %v928, %v932
    %v935 = vadd.f32 %v918, %v933
    %v936 = vadd.f32 %v921, %v933
    %v937 = vadd.f32 %v924, %v933
    %v938 = vadd.f32 %v927, %v933
    %v939 = vmax.f32 %v935, 0.0
    %v940 = vmax.f32 %v936, 0.0
    %v941 = vmax.f32 %v937, 0.0
    %v942 = vmax.f32 %v938, 0.0
    %v943 = vld [vmem:[%s7] sm:$0xff]
    %v944 = vld [vmem:[%s7 + $0x8] sm:$0xff]
    %946 = vset.pattern.permute.xlu0 0
    %947 = vperm.xlu0 %946, %v939
    %v948 = vpop.permute.xlu0 %947
    %951 = vset.pattern.permute.xlu0 0
    %952 = vperm.xlu0 %951, %v940
    %v953 = vpop.permute.xlu0 %952
    %956 = vset.pattern.permute.xlu0 0
    %957 = vperm.xlu0 %956, %v941
    %v958 = vpop.permute.xlu0 %957
    %961 = vset.pattern.permute.xlu0 0
    %962 = vperm.xlu0 %961, %v942
    %v963 = vpop.permute.xlu0 %962
    %v965 = vmul.f32 %v948, %v943
    %v966 = vmul.f32 %v953, %v944
    %v967 = vmul.f32 %v958, %v943
    %v968 = vmul.f32 %v963, %v944
    %vm969 = vcmask 64512
    %v970 = vsel %vm969, %v965, 0.0
    %v971 = vsel %vm969, %v966, 0.0
    %v972 = vadd.f32 %v970, %v971
    %v973 = vrot.slane %v972, 4
    %v974 = vadd.f32 %v972, %v973
    %v975 = vrot.slane %v974, 2
    %v976 = vadd.f32 %v974, %v975
    %v977 = vrot.slane %v976, 1
    %v978 = vadd.f32 %v976, %v977
    %v979 = vsel %vm969, %v967, 0.0
    %v980 = vsel %vm969, %v968, 0.0
    %v981 = vadd.f32 %v979, %v980
    %v982 = vrot.slane %v981, 4
    %v983 = vadd.f32 %v981, %v982
    %v984 = vrot.slane %v983, 2
    %v985 = vadd.f32 %v983, %v984
    %v986 = vrot.slane %v985, 1
    %v987 = vadd.f32 %v985, %v986
    %v988 = vld [vmem:[%s8] sm:$0x1]
    %v990 = vlaneseq
    %v991 = vshrl.u32 %v990, 7
    %v992 = vsub.s32 0, %v991
    %v993 = vrot.slane %v988, %v992
    %v995 = vadd.f32 %v978, %v993
    %v996 = vadd.f32 %v987, %v993
    %v999 = vrot.slane %v996, 7
    %vm1000 = vcmask 1041409
    %v1001 = vsel %vm1000, %v999, %v995
    %vm1003 = vcmask 58368
    %1004 = vst.msk [vmem:[#allocation4] sm:$0x3] %vm1003, %v1001
    // Predicated region
    $region38: #{_lambda_.1} parent=1 // pred_check
      _
    $region39: #{_lambda_.1} parent=1 // pred_check_branch
      %1006 = sbr.rel (0) target = $region41
    $region40: #{_lambda_.1} parent=1 // pred_region
      %s1008 = ssub.s32 32, 32
      %1009 = vsyncadd [#allocation5], %s1008
      %s1011 = sshll.u32 [#allocation4], 4
      %s1012 = int_to_ptr.vmem [resolvable:$true] %s1011
      %1014 = dma.vmem_to_hbm [thread:$0]  %s1012, 32, %s9, [#allocation5]
    $region41: #{_lambda_.1} parent=1 // pred_fallthru
      _
    // Predicated region
    $region42: #{_lambda_.1} parent=1 // pred_check
      _
    $region43: #{_lambda_.1} parent=1 // pred_check_branch
      %1016 = sbr.rel (0) target = $region45
    $region44: #{_lambda_.1} parent=1 // pred_region
      %1017 = dma.done [#allocation5], 32
    $region45: #{_lambda_.1} parent=1 // pred_fallthru
      _
    %1018 = vsyncpa [#allocation5], 1

</llo_original>
